<compile_context>
chip_gen: v5e
topology: v5e:2x2
jax: 0.10.0
libtpu: 0.0.40
codegen_flags: <defaults>
</compile_context>

<pallas_src>
import functools

import jax
import jax.numpy as jnp
import numpy as np
from jax.experimental import pallas as pl
from jax.experimental.pallas import tpu as pltpu


# ---------------------------------------------------------------------------
# Kernel
# ---------------------------------------------------------------------------
def _focal_kernel(pred_ref, gold_ref, out_ref, *, gamma, n_rows):
    """One (batch b, pixel-chunk p, row-block j) step.

    pred_ref / gold_ref : (1, C, S, 128)  native dtype (C leading, pixels dense)
    out_ref             : (1, 1, S, 128)  f32 per-(batch, chunk) partial sums,
                           resident accumulator across the j (reduction) axis.
    n_rows              : total number of valid 128-pixel rows (HW // 128).
    """
    p_chunk = pl.program_id(1)
    j = pl.program_id(2)

    @pl.when(j == 0)
    def _init():
        out_ref[...] = jnp.zeros_like(out_ref)

    x = pred_ref[0].astype(jnp.float32)  # (C, S, 128)
    g = gold_ref[0].astype(jnp.float32)  # (C, S, 128)

    # Soft-target cross entropy per pixel.  Channel reductions are over the
    # leading (non-tiled) axis -> plain VPU max/add across C dense slabs.
    m = jnp.max(x, axis=0)                                 # (S, 128)
    z = jnp.sum(jnp.exp(x - m[None]), axis=0)              # (S, 128)
    lse = m + jnp.log(z)                                   # (S, 128)
    logp = -jnp.sum(g * (x - lse[None]), axis=0)           # (S, 128)

    if gamma == 0.0:
        loss = logp
    else:
        prob = jnp.exp(-logp)
        base = jnp.maximum(1.0 - prob, 0.0)  # clamp: fp rounding can make p > 1
        if float(gamma).is_integer():
            focal = base
            for _ in range(int(gamma) - 1):   # integer gamma -> VPU multiplies
                focal = focal * base
        else:
            focal = jnp.power(base, gamma)    # non-integer gamma -> EUP path
        loss = focal * logp

    # Mask out rows beyond HW//128 (ragged last block and clamped duplicate
    # blocks from the parallel-chunk split).  jnp.where is a select, so any
    # garbage/NaN read from the out-of-bounds part of the block is dropped.
    s_blk = x.shape[1]
    block_idx = p_chunk * pl.num_programs(2) + j           # intended block id
    row_ids = block_idx * s_blk + jax.lax.broadcasted_iota(
        jnp.int32, (s_blk, 128), 0)
    loss = jnp.where(row_ids < n_rows, loss, 0.0)

    # Pure vector add on the hot path; cross-lane reduction deferred to JAX.
    out_ref[0, 0] = out_ref[0, 0] + loss


# ---------------------------------------------------------------------------
# Tiling / VMEM budget
# ---------------------------------------------------------------------------
def _vmem_capacity_bytes():
    try:
        cap = int(pltpu.get_tpu_info().vmem_capacity_bytes)
        if cap > 0:
            return cap
    except Exception:
        pass
    return 64 * 1024 * 1024  # conservative: v7x per-TensorCore VMEM


def _pallas_focal_partial(pred4, gold4, gamma, max_block_rows=None):
    """pred4/gold4: (B, C, N128, 128) native dtype.  Returns (B,) f32 loss sums."""
    B, C, N128, _ = pred4.shape
    itemsize = pred4.dtype.itemsize

    # --- VMEM budget (per-generation aware via get_tpu_info) ----------------
    cap = _vmem_capacity_bytes()
    vmem_limit = min(cap * 3 // 4, 96 * 1024 * 1024)   # 48 MiB v7x / 96 MiB v5e,v6e
    budget = vmem_limit * 3 // 4                        # headroom for compiler scratch

    # Bytes per 128-pixel row of one block: 2 inputs x 2 pipeline buffers in
    # native dtype + ~3 f32 temporaries inside the kernel.  No sublane padding
    # term is needed: C is a leading axis, pixels fully populate (S, 128) tiles.
    per_row = 128 * C * (4 * itemsize + 3 * 4)
    s_blk = budget // per_row
    # Cap each input block at ~4 MiB — already plenty to hit the HBM roofline.
    s_blk = min(s_blk, (4 * 1024 * 1024) // (128 * C * itemsize))
    if max_block_rows is not None:
        s_blk = min(s_blk, max_block_rows)
    if B == 1 and N128 >= 16:
        # Guarantee >=2 pixel chunks so both v7x TensorCores get work.
        s_blk = min(s_blk, max(8, ((N128 // 2) // 8) * 8))
    if s_blk >= N128:
        s_blk = N128                       # full extent: always a legal block
    else:
        s_blk = max(8, (s_blk // 8) * 8)   # sublane-aligned

    n_blocks = pl.cdiv(N128, s_blk)
    n_chunks = 2 if (B == 1 and n_blocks >= 2) else 1
    blocks_per_chunk = pl.cdiv(n_blocks, n_chunks)

    def in_map(b, p, j):
        # Clamp so a short last chunk never issues a fully out-of-bounds DMA;
        # the duplicate block it reads is zeroed by the in-kernel row mask.
        blk = jnp.minimum(p * blocks_per_chunk + j, n_blocks - 1)
        return (b, 0, blk, 0)

    out_map = lambda b, p, j: (b, p, 0, 0)

    partial = pl.pallas_call(
        functools.partial(_focal_kernel, gamma=float(gamma), n_rows=N128),
        out_shape=jax.ShapeDtypeStruct((B, n_chunks, s_blk, 128), jnp.float32),
        grid_spec=pltpu.PrefetchScalarGridSpec(
            num_scalar_prefetch=0,
            grid=(B, n_chunks, blocks_per_chunk),
            in_specs=[
                pl.BlockSpec((1, C, s_blk, 128), in_map),
                pl.BlockSpec((1, C, s_blk, 128), in_map),
            ],
            out_specs=pl.BlockSpec((1, 1, s_blk, 128), out_map),
        ),
        compiler_params=pltpu.CompilerParams(
            # batch + pixel-chunk axes are independent (shardable across v7x's
            # two TensorCores); the row-block axis is the reduction.
            dimension_semantics=("parallel", "parallel", "arbitrary"),
            vmem_limit_bytes=int(vmem_limit),
        ),
    )(pred4, gold4)

    # Tiny JAX epilogue: cross-lane / cross-chunk reduce to per-batch sums.
    return jnp.sum(partial, axis=(1, 2, 3))  # (B,)


# ---------------------------------------------------------------------------
# Wrapper / module
# ---------------------------------------------------------------------------
def soft_focal_loss_single(pred, gold, weight=None, *, gamma=0.0,
                           min_pallas_bytes=1 << 20, max_block_rows=None):
    """pred, gold: (B, C, H, W); weight: (B,) or None. Returns scalar mean loss."""
    B, C, H, W = pred.shape
    HW = H * W
    nbytes = B * C * HW * pred.dtype.itemsize
    use_pallas = (HW % 128 == 0) and (nbytes >= min_pallas_bytes)

    if use_pallas:
        # Free regroup of the contiguous trailing H*W axis — no transpose/copy.
        pred4 = pred.reshape(B, C, HW // 128, 128)
        gold4 = gold.reshape(B, C, HW // 128, 128)
        per_batch = _pallas_focal_partial(pred4, gold4, gamma,
                                          max_block_rows=max_block_rows)
    else:
        # Tiny scale (or H*W not a multiple of 128): plain XLA — a pallas_call's
        # launch/pipeline overhead would dominate the sub-microsecond of work.
        x = pred.astype(jnp.float32)
        g = gold.astype(jnp.float32)
        logp = -jnp.sum(g * jax.nn.log_softmax(x, axis=1), axis=1)  # (B, H, W)
        if gamma == 0.0:
            loss = logp
        else:
            p = jnp.exp(-logp)
            loss = jnp.power(jnp.maximum(1.0 - p, 0.0), float(gamma)) * logp
        per_batch = jnp.sum(loss.reshape(B, -1), axis=-1)

    if weight is not None:
        per_batch = per_batch * weight.astype(jnp.float32)
    return jnp.sum(per_batch) / (B * HW)


class SoftFocalLoss:
    """Pallas-backed equivalent of the PyTorch SoftFocalLoss module (forward)."""

    def __init__(self, gamma=0, min_pallas_bytes=1 << 20):
        self.gamma = float(gamma)
        self.min_pallas_bytes = int(min_pallas_bytes)

    def __call__(self, pred, gold, weight=None):
        # PyTorch forward only implements the list case.
        assert isinstance(pred, (list, tuple)), "only list inputs are supported"
        losses = [
            soft_focal_loss_single(p, g, weight=weight, gamma=self.gamma,
                                   min_pallas_bytes=self.min_pallas_bytes)
            for p, g in zip(pred, gold)
        ]
        return sum(losses) / len(losses)


# ---------------------------------------------------------------------------
# Reference + self-test
# ---------------------------------------------------------------------------
def _reference_single(pred, gold, weight, gamma):
    B, C, H, W = pred.shape
    x = jnp.transpose(pred, (0, 2, 3, 1)).reshape(B * H * W, C).astype(jnp.float32)
    g = jnp.transpose(gold, (0, 2, 3, 1)).reshape(B * H * W, C).astype(jnp.float32)
    logp = -jnp.sum(g * jax.nn.log_softmax(x, axis=-1), axis=-1)
    p = jnp.exp(-logp)
    loss = jnp.power(1.0 - p, gamma) * logp if gamma != 0 else logp
    loss = loss.reshape(B, H, W)
    if weight is not None:
        loss = loss * weight[:, None, None]
    return jnp.mean(loss)


if __name__ == "__main__":
    key = jax.random.PRNGKey(0)
    k = jax.random.split(key, 8)

    # Case A: multi-scale list, B=2.  The 16x16 scale takes the Pallas path
    # (HW=256 rows of 128), the 8x8 scale (HW=64) takes the tiny-scale XLA path.
    B, C = 2, 4
    pred_list = [
        jax.random.normal(k[0], (B, C, 16, 16), jnp.float32),
        jax.random.normal(k[1], (B, C, 8, 8), jnp.float32),
    ]
    gold_list = [
        jax.nn.softmax(jax.random.normal(k[2], (B, C, 16, 16), jnp.float32), axis=1),
        jax.nn.softmax(jax.random.normal(k[3], (B, C, 8, 8), jnp.float32), axis=1),
    ]
    weight = jax.random.uniform(k[4], (B,), jnp.float32) + 0.5

    for gamma, w in [(0.0, None), (2.0, weight)]:
        loss_fn = SoftFocalLoss(gamma=gamma, min_pallas_bytes=0)
        out = jax.block_until_ready(loss_fn(pred_list, gold_list, weight=w))
        ref = sum(
            _reference_single(p, g, w, gamma) for p, g in zip(pred_list, gold_list)
        ) / len(pred_list)
        np.testing.assert_allclose(np.asarray(out), np.asarray(ref),
                                   rtol=1e-5, atol=1e-5)

    # Case B: B == 1 with a forced small block — exercises the dual-chunk
    # "parallel" pixel split (v7x), the ragged-tail row mask and the clamped
    # index_map duplicate-block path.
    B1, C1, H1, W1 = 1, 4, 40, 64   # HW = 2560 -> 20 rows of 128
    pred1 = jax.random.normal(k[5], (B1, C1, H1, W1), jnp.float32)
    gold1 = jax.nn.softmax(
        jax.random.normal(k[6], (B1, C1, H1, W1), jnp.float32), axis=1)
    w1 = jax.random.uniform(k[7], (B1,), jnp.float32) + 0.5
    out1 = jax.block_until_ready(
        soft_focal_loss_single(pred1, gold1, weight=w1, gamma=2.0,
                               min_pallas_bytes=0, max_block_rows=8))
    ref1 = _reference_single(pred1, gold1, w1, 2.0)
    np.testing.assert_allclose(np.asarray(out1), np.asarray(ref1),
                               rtol=1e-5, atol=1e-5)

    print("KERNEL_OK")
</pallas_src>

<mosaic_0001>
module attributes {stable_mosaic.version = 11 : i64} {
  func.func @_focal_kernel(%arg0: i32, %arg1: i32, %arg2: i32, %arg3: memref<1x4x2x128xf32, #tpu.memory_space<vmem>>, %arg4: memref<1x4x2x128xf32, #tpu.memory_space<vmem>>, %arg5: memref<1x1x2x128xf32, #tpu.memory_space<vmem>>) attributes {dimension_semantics = [#tpu.dimension_semantics<parallel>, #tpu.dimension_semantics<parallel>, #tpu.dimension_semantics<arbitrary>], iteration_bounds = array<i64: 2, 1, 1>, scalar_prefetch = 0 : i64, scratch_operands = 0 : i64, tpu.core_type = #tpu.core_type<tc>, window_params = [{transform_indices = @transform_0, window_bounds = array<i64: 1, 4, 2, 128>}, {transform_indices = @transform_1, window_bounds = array<i64: 1, 4, 2, 128>}, {transform_indices = @transform_2, window_bounds = array<i64: 1, 1, 2, 128>}]} {
    %c0_i32 = arith.constant 0 : i32
    %0 = arith.cmpi eq, %arg2, %c0_i32 : i32
    %1 = arith.extui %0 : i1 to i32
    %c0_i32_0 = arith.constant 0 : i32
    %2 = arith.cmpi ne, %1, %c0_i32_0 : i32
    scf.if %2 {
      %cst_21 = arith.constant 0.000000e+00 : f32
      %38 = vector.broadcast %cst_21 : f32 to vector<1x1x2x128xf32>
      %c0_22 = arith.constant 0 : index
      %c0_23 = arith.constant 0 : index
      %c0_24 = arith.constant 0 : index
      %c0_25 = arith.constant 0 : index
      %39 = vector.load %arg5[%c0_22, %c0_23, %c0_24, %c0_25] : memref<1x1x2x128xf32, #tpu.memory_space<vmem>>, vector<1x1x2x128xf32>
      tpu.vector_store %arg5[%c0_22, %c0_23, %c0_24, %c0_25], %38 {strides = array<i32>} : memref<1x1x2x128xf32, #tpu.memory_space<vmem>>, vector<1x1x2x128xf32>,
    } else {
    }
    %c0 = arith.constant 0 : index
    %c0_1 = arith.constant 0 : index
    %c0_2 = arith.constant 0 : index
    %c0_3 = arith.constant 0 : index
    %3 = vector.load %arg3[%c0, %c0_1, %c0_2, %c0_3] : memref<1x4x2x128xf32, #tpu.memory_space<vmem>>, vector<1x4x2x128xf32>
    %4 = vector.shape_cast %3 : vector<1x4x2x128xf32> to vector<4x2x128xf32>
    %c0_4 = arith.constant 0 : index
    %c0_5 = arith.constant 0 : index
    %c0_6 = arith.constant 0 : index
    %c0_7 = arith.constant 0 : index
    %5 = vector.load %arg4[%c0_4, %c0_5, %c0_6, %c0_7] : memref<1x4x2x128xf32, #tpu.memory_space<vmem>>, vector<1x4x2x128xf32>
    %6 = vector.shape_cast %5 : vector<1x4x2x128xf32> to vector<4x2x128xf32>
    %cst = arith.constant dense<0xFF800000> : vector<2x128xf32>
    %7 = vector.multi_reduction <maximumf>, %4, %cst [0] : vector<4x2x128xf32> to vector<2x128xf32>
    %8 = vector.shape_cast %7 : vector<2x128xf32> to vector<1x2x128xf32>
    %9 = vector.broadcast %8 : vector<1x2x128xf32> to vector<4x2x128xf32>
    %10 = arith.subf %4, %9 : vector<4x2x128xf32>
    %11 = math.exp %10 : vector<4x2x128xf32>
    %cst_8 = arith.constant dense<0.000000e+00> : vector<2x128xf32>
    %12 = vector.multi_reduction <add>, %11, %cst_8 [0] : vector<4x2x128xf32> to vector<2x128xf32>
    %13 = math.log %12 : vector<2x128xf32>
    %14 = arith.addf %7, %13 : vector<2x128xf32>
    %15 = vector.shape_cast %14 : vector<2x128xf32> to vector<1x2x128xf32>
    %16 = vector.broadcast %15 : vector<1x2x128xf32> to vector<4x2x128xf32>
    %17 = arith.subf %4, %16 : vector<4x2x128xf32>
    %18 = arith.mulf %6, %17 : vector<4x2x128xf32>
    %cst_9 = arith.constant dense<0.000000e+00> : vector<2x128xf32>
    %19 = vector.multi_reduction <add>, %18, %cst_9 [0] : vector<4x2x128xf32> to vector<2x128xf32>
    %cst_10 = arith.constant 0.000000e+00 : f32
    %20 = vector.broadcast %cst_10 : f32 to vector<2x128xf32>
    %21 = arith.subf %20, %19 : vector<2x128xf32>
    %c1_i32 = arith.constant 1 : i32
    %22 = arith.muli %arg1, %c1_i32 : i32
    %23 = arith.addi %22, %arg2 : i32
    %c2_i32 = arith.constant 2 : i32
    %24 = arith.muli %23, %c2_i32 : i32
    %25 = tpu.iota {dimensions = array<i32: 0>} : vector<2x128xi32>
    %26 = vector.broadcast %24 : i32 to vector<2x128xi32>
    %27 = arith.addi %26, %25 : vector<2x128xi32>
    %c2_i32_11 = arith.constant 2 : i32
    %28 = vector.broadcast %c2_i32_11 : i32 to vector<2x128xi32>
    %29 = arith.cmpi slt, %27, %28 : vector<2x128xi32>
    %cst_12 = arith.constant 0.000000e+00 : f32
    %30 = vector.broadcast %cst_12 : f32 to vector<2x128xf32>
    %31 = arith.select %29, %21, %30 : vector<2x128xi1>, vector<2x128xf32>
    %c0_13 = arith.constant 0 : index
    %c0_14 = arith.constant 0 : index
    %c0_15 = arith.constant 0 : index
    %c0_16 = arith.constant 0 : index
    %32 = vector.load %arg5[%c0_13, %c0_14, %c0_15, %c0_16] : memref<1x1x2x128xf32, #tpu.memory_space<vmem>>, vector<1x1x2x128xf32>
    %33 = vector.shape_cast %32 : vector<1x1x2x128xf32> to vector<2x128xf32>
    %34 = arith.addf %33, %31 : vector<2x128xf32>
    %c0_17 = arith.constant 0 : index
    %c0_18 = arith.constant 0 : index
    %c0_19 = arith.constant 0 : index
    %c0_20 = arith.constant 0 : index
    %35 = vector.load %arg5[%c0_17, %c0_18, %c0_19, %c0_20] : memref<1x1x2x128xf32, #tpu.memory_space<vmem>>, vector<1x1x2x128xf32>
    %36 = vector.shape_cast %35 : vector<1x1x2x128xf32> to vector<2x128xf32>
    %37 = vector.shape_cast %34 : vector<2x128xf32> to vector<1x1x2x128xf32>
    tpu.vector_store %arg5[%c0_17, %c0_18, %c0_19, %c0_20], %37 {strides = array<i32>} : memref<1x1x2x128xf32, #tpu.memory_space<vmem>>, vector<1x1x2x128xf32>,
    return
  }
  func.func @transform_0(%arg0: i32, %arg1: i32, %arg2: i32) -> (i32, i32, i32, i32) {
    %c1_i32 = arith.constant 1 : i32
    %0 = arith.muli %arg1, %c1_i32 : i32
    %1 = arith.addi %0, %arg2 : i32
    %c0_i32 = arith.constant 0 : i32
    %2 = arith.minsi %1, %c0_i32 : i32
    %c0_i32_0 = arith.constant 0 : i32
    %c0_i32_1 = arith.constant 0 : i32
    %c0_i32_2 = arith.constant 0 : i32
    return %arg0, %c0_i32_0, %2, %c0_i32_1 : i32, i32, i32, i32
  }
  func.func @transform_1(%arg0: i32, %arg1: i32, %arg2: i32) -> (i32, i32, i32, i32) {
    %c1_i32 = arith.constant 1 : i32
    %0 = arith.muli %arg1, %c1_i32 : i32
    %1 = arith.addi %0, %arg2 : i32
    %c0_i32 = arith.constant 0 : i32
    %2 = arith.minsi %1, %c0_i32 : i32
    %c0_i32_0 = arith.constant 0 : i32
    %c0_i32_1 = arith.constant 0 : i32
    %c0_i32_2 = arith.constant 0 : i32
    return %arg0, %c0_i32_0, %2, %c0_i32_1 : i32, i32, i32, i32
  }
  func.func @transform_2(%arg0: i32, %arg1: i32, %arg2: i32) -> (i32, i32, i32, i32) {
    %c0_i32 = arith.constant 0 : i32
    %c0_i32_0 = arith.constant 0 : i32
    %c0_i32_1 = arith.constant 0 : i32
    return %arg0, %arg1, %c0_i32, %c0_i32_0 : i32, i32, i32, i32
  }
}

</mosaic_0001>

<llo_original>
// kernel: tpu_custom_call.1
$region0: #{tpu_custom_call.1}
  #allocation0 [shape = 'u32[]', space=smem, size = 0x4, offset = 0x4, fixed_abs, tag = 'smem constant byte address 0x4 - core index']
  #allocation1 [shape = 'u32[72,128]{1,0:T(1,128)}', space=vmem, size = 0x9000, scoped, tag = 'internal scratch']
  %s0 = inlined_call_operand.hbm [shape: f32[2,4,2,128], index: 0, kind: input, shape index: {}]
  %s1 = inlined_call_operand.hbm [shape: f32[2,4,2,128], index: 1, kind: input, shape index: {}]
  %s2 = inlined_call_operand.hbm [shape: f32[2,1,2,128], index: 2, kind: output, shape index: {}]
  %s3 = sld [smem:[#allocation0]]
  $region53: #{tpu_custom_call.1} parent=0
    _
  %s5 = ssub.s32 1, %s3
  %s6 = scalar_select 0, %s5, %s3
  $region1: #{tpu_custom_call.1} parent=0
    #allocation2 [shape = 'u8[8192]{0}', space=vmem, size = 0x2000, scoped, tag = 'input window, operand 0']
    #allocation3 [shape = 's32[2]{0}', space=sflag, size = 0x8, scoped, tag = 'scoped memory for tpu_custom_call.1']
    #allocation4 [shape = 's32[2]{0}', space=sflag, size = 0x8, scoped, tag = 'scoped memory for tpu_custom_call.1']
    #allocation5 [shape = 'u8[8192]{0}', space=vmem, size = 0x2000, scoped, tag = 'input window, operand 1']
    #allocation6 [shape = 's32[2]{0}', space=sflag, size = 0x8, scoped, tag = 'scoped memory for tpu_custom_call.1']
    #allocation7 [shape = 'u8[2048]{0}', space=vmem, size = 0x800, scoped, tag = 'output window, operand 0']
    %7 = vsyncpa [#allocation3], 0
    %s8 = scalar_lea.sflag [#allocation3], 1
    %9 = vsyncpa %s8, 0
    %10 = vsyncpa [#allocation6], 0
    %s11 = scalar_lea.sflag [#allocation6], 1
    %12 = vsyncpa %s11, 0
    %13 = vsyncpa [#allocation4], 0
    %s14 = scalar_lea.sflag [#allocation4], 1
    %15 = vsyncpa %s14, 0
    loop: start=0, step=1, limit=4
    $region2: #{tpu_custom_call.1} parent=1 // loop_pre_header
      _
    $region3: #{tpu_custom_call.1} parent=1 // loop_header
      %s17 = sphi 0, %s21
      %p18 = scmp.ge.s32.totalorder %s17, 4
      %s24 = sphi 0, %s43
      %s25 = sphi 0, %s39
      %s26 = sphi 0, %s35
      %s27 = sphi 0, %s24
      %s28 = sphi 0, %s25
      %s29 = sphi 0, %s26
      %s30 = sphi 0, %s27
      %s31 = sphi 0, %s28
      %s32 = sphi 0, %s29
      %s54 = sphi 0, %s56
      %s57 = sphi 0, %s54
      %s58 = sphi 0, %s57
      %s74 = sphi 0, %s58
      %s88 = sphi 0, %s90
      %s91 = sphi 0, %s88
      %s92 = sphi 0, %s91
      %s108 = sphi 0, %s92
      %s116 = sphi 0, %s118
      %s119 = sphi 0, %s116
      %s120 = sphi 0, %s119
      %s136 = sphi 0, %s120
    $region4: #{tpu_custom_call.1} parent=1 // loop_header_branch
      %20 = sbr.rel (%p18) target = $region8
    $region5: #{tpu_custom_call.1} parent=1 // loop_body
      %s22 = ssub.s32 %s17, 1
      %s23 = ssub.s32 %s17, 2
      %s33 = sadd.s32 1, %s26
      %p34 = scmp.ge.s32.totalorder %s33, 1
      %s35 = scalar_select %p34, 0, %s33
      %s36 = sadd.s32 1, %s25
      %s37 = scalar_select %p34, %s36, %s25
      %p38 = scmp.ge.s32.totalorder %s37, 1
      %s39 = scalar_select %p38, 0, %s37
      %s40 = sadd.s32 1, %s24
      %s41 = scalar_select %p38, %s40, %s24
      %p42 = scmp.ge.s32.totalorder %s41, 2
      %s43 = scalar_select %p42, 0, %s41
      %s44 = sadd.s32 %s25, %s26
      %p45 = scmp.lt.s32.totalorder %s44, 0
      %s46 = scalar_select %p45, %s44, 0
      %s47 = sadd.s32 %s39, %s35
      %p48 = scmp.lt.s32.totalorder %s47, 0
      %s49 = scalar_select %p48, %s47, 0
      %s50 = ssub.s32 %s24, %s43
      %s51 = ssub.s32 %s46, %s49
      %s52 = sor.u32 %s50, %s51
      %p53 = scmp.eq.s32.totalorder %s52, 0
      %s55 = sadd.s32 %s54, 1
      %s56 = scalar_select %p53, %s54, %s55
      %p59 = pneg %p53
      %p60 = scmp.eq.s32.totalorder %s17, 1
      %p61 = por %p59, %p60
      %p62 = scmp.ne.s32.totalorder %s54, %s57
      %p63 = scmp.eq.s32.totalorder %s17, 0
      %p64 = por %p62, %p63
      %p65 = scmp.ne.s32.totalorder %s54, %s57
      %p66 = scmp.eq.s32.totalorder %s22, 1
      %p67 = por %p65, %p66
      %p68 = scmp.ne.s32.totalorder %s57, %s58
      %p69 = scmp.eq.s32.totalorder %s22, 0
      %p70 = por %p68, %p69
      %p71 = scmp.ne.s32.totalorder %s57, %s58
      %p72 = scmp.eq.s32.totalorder %s23, 1
      %p73 = por %p71, %p72
      %p75 = scmp.ne.s32.totalorder %s58, %s74
      %p76 = scmp.eq.s32.totalorder %s23, 0
      %p77 = por %p75, %p76
      %s78 = sadd.s32 %s25, %s26
      %p79 = scmp.lt.s32.totalorder %s78, 0
      %s80 = scalar_select %p79, %s78, 0
      %s81 = sadd.s32 %s39, %s35
      %p82 = scmp.lt.s32.totalorder %s81, 0
      %s83 = scalar_select %p82, %s81, 0
      %s84 = ssub.s32 %s24, %s43
      %s85 = ssub.s32 %s80, %s83
      %s86 = sor.u32 %s84, %s85
      %p87 = scmp.eq.s32.totalorder %s86, 0
      %s89 = sadd.s32 %s88, 1
      %s90 = scalar_select %p87, %s88, %s89
      %p93 = pneg %p87
      %p94 = scmp.eq.s32.totalorder %s17, 1
      %p95 = por %p93, %p94
      %p96 = scmp.ne.s32.totalorder %s88, %s91
      %p97 = scmp.eq.s32.totalorder %s17, 0
      %p98 = por %p96, %p97
      %p99 = scmp.ne.s32.totalorder %s88, %s91
      %p100 = scmp.eq.s32.totalorder %s22, 1
      %p101 = por %p99, %p100
      %p102 = scmp.ne.s32.totalorder %s91, %s92
      %p103 = scmp.eq.s32.totalorder %s22, 0
      %p104 = por %p102, %p103
      %p105 = scmp.ne.s32.totalorder %s91, %s92
      %p106 = scmp.eq.s32.totalorder %s23, 1
      %p107 = por %p105, %p106
      %p109 = scmp.ne.s32.totalorder %s92, %s108
      %p110 = scmp.eq.s32.totalorder %s23, 0
      %p111 = por %p109, %p110
      %s112 = ssub.s32 %s24, %s43
      %s113 = ssub.s32 %s25, %s39
      %s114 = sor.u32 %s112, %s113
      %p115 = scmp.eq.s32.totalorder %s114, 0
      %s117 = sadd.s32 %s116, 1
      %s118 = scalar_select %p115, %s116, %s117
      %p121 = pneg %p115
      %p122 = scmp.eq.s32.totalorder %s17, 1
      %p123 = por %p121, %p122
      %p124 = scmp.ne.s32.totalorder %s116, %s119
      %p125 = scmp.eq.s32.totalorder %s17, 0
      %p126 = por %p124, %p125
      %p127 = scmp.ne.s32.totalorder %s116, %s119
      %p128 = scmp.eq.s32.totalorder %s22, 1
      %p129 = por %p127, %p128
      %p130 = scmp.ne.s32.totalorder %s119, %s120
      %p131 = scmp.eq.s32.totalorder %s22, 0
      %p132 = por %p130, %p131
      %p133 = scmp.ne.s32.totalorder %s119, %s120
      %p134 = scmp.eq.s32.totalorder %s23, 1
      %p135 = por %p133, %p134
      %p137 = scmp.ne.s32.totalorder %s120, %s136
      %p138 = scmp.eq.s32.totalorder %s23, 0
      %p139 = por %p137, %p138
      %p140 = scmp.le.s32.totalorder 1, %s17
      %p141 = scmp.lt.s32.totalorder %s17, 3
      %p142 = pnand %p140, %p141
      %p143 = pneg %p142
      // Predicated region
      $region9: #{tpu_custom_call.1} parent=5 // pred_check
        _
      $region10: #{tpu_custom_call.1} parent=5 // pred_check_branch
        %145 = sbr.rel (%p142) target = $region12
      $region11: #{tpu_custom_call.1} parent=5 // pred_region
        %s146 = ssub.s32 %s17, 1
      $region12: #{tpu_custom_call.1} parent=5 // pred_fallthru
        _
      %p147 = scmp.lt.s32.totalorder %s17, 2
      // Predicated region
      $region13: #{tpu_custom_call.1} parent=5 // pred_check
        %p148 = pneg %p147
      $region14: #{tpu_custom_call.1} parent=5 // pred_check_branch
        %150 = sbr.rel (%p148) target = $region16
      $region15: #{tpu_custom_call.1} parent=5 // pred_region
        // Predicated region
        $region17: #{tpu_custom_call.1} parent=15 // pred_check
          %p151 = pneg %p64
        $region18: #{tpu_custom_call.1} parent=15 // pred_check_branch
          %153 = sbr.rel (%p151) target = $region20
        $region19: #{tpu_custom_call.1} parent=15 // pred_region
          %s154 = sand.u32 %s54, 1
          %s155 = scalar_lea.sflag [#allocation3], %s154
          %s156 = sand.u32 %s54, 1
          %s157 = smul.addr %s156, 8
          %s158 = scalar_lea.vmem [#allocation2], %s157
          %s159 = sadd.s32 %s25, %s26
          %p160 = scmp.lt.s32.totalorder %s159, 0
          %s161 = scalar_select %p160, %s159, 0
          %163 = vsyncadd %s155, 0
          %s164 = smul.addr %s24, 4
          %s165 = sadd.s32 %s161, %s164
          %s166 = smul.addr %s165, 2
          %s167 = scalar_lea.hbm %s0, %s166
          %s168 = sshll.u32 %s167, 4
          %s169 = int_to_ptr.hbm [resolvable:$true] %s168
          %s170 = sshll.u32 %s158, 4
          %s171 = int_to_ptr.vmem [resolvable:$true] %s170
          %176 = dma.hbm_to_vmem [thread:$0]  %s169, 128, %s171, %s155, 32, 32, 2
        $region20: #{tpu_custom_call.1} parent=15 // pred_fallthru
          _
        // Predicated region
        $region21: #{tpu_custom_call.1} parent=15 // pred_check
          %p177 = pneg %p98
        $region22: #{tpu_custom_call.1} parent=15 // pred_check_branch
          %179 = sbr.rel (%p177) target = $region24
        $region23: #{tpu_custom_call.1} parent=15 // pred_region
          %s180 = sand.u32 %s88, 1
          %s181 = scalar_lea.sflag [#allocation6], %s180
          %s182 = sand.u32 %s88, 1
          %s183 = smul.addr %s182, 8
          %s184 = scalar_lea.vmem [#allocation5], %s183
          %s185 = sadd.s32 %s25, %s26
          %p186 = scmp.lt.s32.totalorder %s185, 0
          %s187 = scalar_select %p186, %s185, 0
          %189 = vsyncadd %s181, 0
          %s190 = smul.addr %s24, 4
          %s191 = sadd.s32 %s187, %s190
          %s192 = smul.addr %s191, 2
          %s193 = scalar_lea.hbm %s1, %s192
          %s194 = sshll.u32 %s193, 4
          %s195 = int_to_ptr.hbm [resolvable:$true] %s194
          %s196 = sshll.u32 %s184, 4
          %s197 = int_to_ptr.vmem [resolvable:$true] %s196
          %202 = dma.hbm_to_vmem [thread:$0]  %s195, 128, %s197, %s181, 32, 32, 2
        $region24: #{tpu_custom_call.1} parent=15 // pred_fallthru
          _
      $region16: #{tpu_custom_call.1} parent=5 // pred_fallthru
        _
      %p203 = scmp.le.s32.totalorder 1, %s17
      %p204 = scmp.lt.s32.totalorder %s17, 3
      %p205 = pnand %p203, %p204
      %p206 = pneg %p205
      // Predicated region
      $region25: #{tpu_custom_call.1} parent=5 // pred_check
        _
      $region26: #{tpu_custom_call.1} parent=5 // pred_check_branch
        %208 = sbr.rel (%p205) target = $region28
      $region27: #{tpu_custom_call.1} parent=5 // pred_region
        %s209 = ssub.s32 %s17, 1
        %s210 = sand.u32 %s57, 1
        %s211 = scalar_lea.sflag [#allocation3], %s210
        %s212 = sand.u32 %s57, 1
        %s213 = smul.addr %s212, 8
        %s214 = scalar_lea.vmem [#allocation2], %s213
        // Predicated region
        $region29: #{tpu_custom_call.1} parent=27 // pred_check
          %p215 = pneg %p70
        $region30: #{tpu_custom_call.1} parent=27 // pred_check_branch
          %217 = sbr.rel (%p215) target = $region32
        $region31: #{tpu_custom_call.1} parent=27 // pred_region
          %219 = dma.done %s211, 128
        $region32: #{tpu_custom_call.1} parent=27 // pred_fallthru
          _
        %s220 = sand.u32 %s91, 1
        %s221 = scalar_lea.sflag [#allocation6], %s220
        %s222 = sand.u32 %s91, 1
        %s223 = smul.addr %s222, 8
        %s224 = scalar_lea.vmem [#allocation5], %s223
        // Predicated region
        $region33: #{tpu_custom_call.1} parent=27 // pred_check
          %p225 = pneg %p104
        $region34: #{tpu_custom_call.1} parent=27 // pred_check_branch
          %227 = sbr.rel (%p225) target = $region36
        $region35: #{tpu_custom_call.1} parent=27 // pred_region
          %229 = dma.done %s221, 128
        $region36: #{tpu_custom_call.1} parent=27 // pred_fallthru
          _
        %s230 = sand.u32 %s57, 1
        %s231 = scalar_lea.sflag [#allocation3], %s230
        %s232 = sand.u32 %s57, 1
        %s233 = smul.addr %s232, 8
        %s234 = scalar_lea.vmem [#allocation2], %s233
        %p235 = pneg %p70
        %p236 = pneg %p67
        %s237 = sand.u32 %s91, 1
        %s238 = scalar_lea.sflag [#allocation6], %s237
        %s239 = sand.u32 %s91, 1
        %s240 = smul.addr %s239, 8
        %s241 = scalar_lea.vmem [#allocation5], %s240
        %p242 = pneg %p104
        %p243 = pneg %p101
        %p244 = pneg %p132
        %p245 = pneg %p129
        %s246 = sand.u32 %s119, 1
        %s247 = scalar_lea.sflag [#allocation4], %s246
        %s248 = sand.u32 %s119, 1
        %s249 = smul.addr %s248, 2
        %s250 = scalar_lea.vmem [#allocation7], %s249
        %s251 = sadd.s32 %s28, %s29
        %p252 = scmp.lt.s32.totalorder %s251, 0
        %s253 = scalar_select %p252, %s251, 0
        %s254 = sadd.s32 %s28, %s29
        %p255 = scmp.lt.s32.totalorder %s254, 0
        %s256 = scalar_select %p255, %s254, 0
        %p257 = scmp.eq.s32.totalorder %s29, 0
        // Predicated region
        $region37: #{tpu_custom_call.1} parent=27 // pred_check
          %p258 = pneg %p257
        $region38: #{tpu_custom_call.1} parent=27 // pred_check_branch
          %260 = sbr.rel (%p258) target = $region40
        $region39: #{tpu_custom_call.1} parent=27 // pred_region
          %261 = vst [vmem:[%s250] sm:$0x3] 0.0
        $region40: #{tpu_custom_call.1} parent=27 // pred_fallthru
          _
        %v262 = vld [vmem:[%s214] sm:$0x3]
        %v263 = vld [vmem:[%s214 + $0x2] sm:$0x3]
        %v264 = vld [vmem:[%s214 + $0x4] sm:$0x3]
        %v265 = vld [vmem:[%s214 + $0x6] sm:$0x3]
        %v266 = vld [vmem:[%s224] sm:$0x3]
        %v267 = vld [vmem:[%s224 + $0x2] sm:$0x3]
        %v268 = vld [vmem:[%s224 + $0x4] sm:$0x3]
        %v269 = vld [vmem:[%s224 + $0x6] sm:$0x3]
        %vm270 = vcmask 1041408
        %v271 = vsel %vm270, %v262, -inf
        %v272 = vsel %vm270, %v263, -inf
        %v273 = vsel %vm270, %v264, -inf
        %v274 = vsel %vm270, %v265, -inf
        %v275 = vmax.f32 %v271, %v272
        %v276 = vmax.f32 %v273, %v274
        %v277 = vmax.f32 %v275, %v276
        %v278 = vsub.f32 %v262, %v277
        %v279 = vsub.f32 %v263, %v277
        %v280 = vsub.f32 %v264, %v277
        %v281 = vsub.f32 %v265, %v277
        %v282 = vmul.f32 %v278, 1.442695
        %v283 = vpow.pop %v282
        %v284 = vmul.f32 %v279, 1.442695
        %v285 = vpow.pop %v284
        %v286 = vmul.f32 %v280, 1.442695
        %v287 = vpow.pop %v286
        %v288 = vmul.f32 %v281, 1.442695
        %v289 = vpow.pop %v288
        %v290 = vsel %vm270, %v283, 0.0
        %v291 = vsel %vm270, %v285, 0.0
        %v292 = vadd.f32 %v290, %v291
        %v293 = vsel %vm270, %v287, 0.0
        %v294 = vadd.f32 %v292, %v293
        %v295 = vsel %vm270, %v289, 0.0
        %v296 = vadd.f32 %v294, %v295
        %v297 = vlog2.pop %v296
        %v298 = vmul.f32 %v297, 0.6931472
        %v299 = vadd.f32 %v277, %v298
        %v300 = vsub.f32 %v262, %v299
        %v301 = vsub.f32 %v263, %v299
        %v302 = vsub.f32 %v264, %v299
        %v303 = vsub.f32 %v265, %v299
        %v304 = vmul.f32 %v266, %v300
        %v305 = vmul.f32 %v267, %v301
        %v306 = vmul.f32 %v268, %v302
        %v307 = vmul.f32 %v269, %v303
        %v308 = vsel %vm270, %v304, 0.0
        %v309 = vsel %vm270, %v305, 0.0
        %v310 = vadd.f32 %v308, %v309
        %v311 = vsel %vm270, %v306, 0.0
        %v312 = vadd.f32 %v310, %v311
        %v313 = vsel %vm270, %v307, 0.0
        %v314 = vadd.f32 %v312, %v313
        %v315 = vsub.f32 0.0, %v314
        %s316 = sadd.s32 %s28, %s29
        %s317 = smul.u32 %s316, 2
        %v318 = vlaneseq
        %v319 = vshrl.u32 %v318, 7
        %v320 = vstv %s317
        %v321 = vadd.s32 %v320, %v319
        %vm322 = vcmp.lt.s32.totalorder %v321, 2
        %v323 = vsel %vm322, %v315, 0.0
        %v324 = vld [vmem:[%s250] sm:$0x3]
        %v325 = vadd.f32 %v324, %v323
        %326 = vst [vmem:[%s250] sm:$0x3] %v325
        %s327 = sand.u32 %s119, 1
        %s328 = scalar_lea.sflag [#allocation4], %s327
        %s329 = sand.u32 %s119, 1
        %s330 = smul.addr %s329, 2
        %s331 = scalar_lea.vmem [#allocation7], %s330
        // Predicated region
        $region41: #{tpu_custom_call.1} parent=27 // pred_check
          %p332 = pneg %p129
        $region42: #{tpu_custom_call.1} parent=27 // pred_check_branch
          %334 = sbr.rel (%p332) target = $region44
        $region43: #{tpu_custom_call.1} parent=27 // pred_region
          %336 = vsyncadd %s328, 0
          %s337 = sadd.s32 %s28, %s27
          %s338 = smul.addr %s337, 2
          %s339 = scalar_lea.hbm %s2, %s338
          %s341 = sshll.u32 %s331, 4
          %s342 = int_to_ptr.vmem [resolvable:$true] %s341
          %s343 = sshll.u32 %s339, 4
          %s344 = int_to_ptr.hbm [resolvable:$true] %s343
          %346 = dma.vmem_to_hbm [thread:$0]  %s342, 32, %s344, %s328
        $region44: #{tpu_custom_call.1} parent=27 // pred_fallthru
          _
      $region28: #{tpu_custom_call.1} parent=5 // pred_fallthru
        _
      %p347 = scmp.le.s32.totalorder 2, %s17
      // Predicated region
      $region45: #{tpu_custom_call.1} parent=5 // pred_check
        %p348 = pneg %p347
      $region46: #{tpu_custom_call.1} parent=5 // pred_check_branch
        %350 = sbr.rel (%p348) target = $region48
      $region47: #{tpu_custom_call.1} parent=5 // pred_region
        %s351 = ssub.s32 %s17, 2
        // Predicated region
        $region49: #{tpu_custom_call.1} parent=47 // pred_check
          %p352 = pneg %p135
        $region50: #{tpu_custom_call.1} parent=47 // pred_check_branch
          %354 = sbr.rel (%p352) target = $region52
        $region51: #{tpu_custom_call.1} parent=47 // pred_region
          %s355 = sand.u32 %s120, 1
          %s356 = scalar_lea.sflag [#allocation4], %s355
          %s357 = sand.u32 %s120, 1
          %s358 = smul.addr %s357, 2
          %s359 = scalar_lea.vmem [#allocation7], %s358
          %361 = dma.done %s356, 32
        $region52: #{tpu_custom_call.1} parent=47 // pred_fallthru
          _
      $region48: #{tpu_custom_call.1} parent=5 // pred_fallthru
        _
    $region6: #{tpu_custom_call.1} parent=1 // loop_footer
      %s21 = sadd.s32 1, %s17
    $region7: #{tpu_custom_call.1} parent=1 // loop_footer_branch
      %16 = sbr.rel target = $region3
    $region8: #{tpu_custom_call.1} parent=1 // loop_exit
      _
    %362 = vsyncpa [#allocation3], 1
    %s363 = scalar_lea.sflag [#allocation3], 1
    %364 = vsyncpa %s363, 1
    %365 = vsyncpa [#allocation6], 1
    %s366 = scalar_lea.sflag [#allocation6], 1
    %367 = vsyncpa %s366, 1
    %368 = vsyncpa [#allocation4], 1
    %s369 = scalar_lea.sflag [#allocation4], 1
    %370 = vsyncpa %s369, 1

</llo_original>
